<compile_context>
chip_gen: v6e
topology: v6e:2x2x1
jax: 0.10.0
libtpu: 0.0.40
codegen_flags: <defaults>
</compile_context>

<pallas_src>
import math
import functools

import numpy as np
import jax
import jax.numpy as jnp
from jax.experimental import pallas as pl
from jax.experimental.pallas import tpu as pltpu


# ---------------------------------------------------------------------------
# small helpers
# ---------------------------------------------------------------------------

def _round_up(x, m):
    return ((x + m - 1) // m) * m


def _pick_tile(dim, target, quantum):
    """Largest tile <= target that is a multiple of `quantum` and divides dim.
    Falls back to the full dim (always legal: block == full array dim)."""
    if dim <= target:
        return dim
    t = (target // quantum) * quantum
    while t >= quantum:
        if dim % t == 0:
            return t
        t -= quantum
    return dim


def _row_tiling(M, target=512, quantum=8):
    """Return (padded_M, tile). If no bounded divisor exists, pad M so a silent
    full-M tile can never blow the VMEM budget (review fix)."""
    t = _pick_tile(M, target, quantum)
    if t <= 2 * target:
        return M, t
    return _round_up(M, target), target


def _norm_math(x, alpha, bias, eps):
    # PyTorch Norm: alpha * (x - mean) / (std + eps) + bias, std unbiased (n-1).
    d = x.shape[-1]
    mean = jnp.mean(x, axis=-1, keepdims=True)
    cen = x - mean
    var = jnp.sum(cen * cen, axis=-1, keepdims=True) / (d - 1)
    std = jnp.sqrt(var)
    return alpha * cen / (std + eps) + bias


# ---------------------------------------------------------------------------
# Pallas kernels
# ---------------------------------------------------------------------------

def _linear_kernel(x_ref, w_ref, b_ref, o_ref, acc_ref, *, activation):
    # Tiled y = x @ W + b with K-reduction accumulator.
    @pl.when(pl.program_id(2) == 0)
    def _init():
        acc_ref[...] = jnp.zeros_like(acc_ref)

    acc_ref[...] += jnp.dot(
        x_ref[...].astype(jnp.bfloat16),          # bf16 MXU inputs
        w_ref[...],                               # weights stored bf16
        preferred_element_type=jnp.float32)       # f32 accumulation

    @pl.when(pl.program_id(2) == pl.num_programs(2) - 1)
    def _finalize():
        y = acc_ref[...] + b_ref[...]
        if activation == "relu":
            y = jnp.maximum(y, 0.0)
        o_ref[...] = y.astype(o_ref.dtype)        # bf16 out when consumer is MXU


def _pe_norm_kernel(x_ref, pe_ref, a_ref, b_ref, xo_ref, no_ref, *, scale, eps):
    # Fused: x = embed * sqrt(d_model) + pe ; x2 = Norm(x)
    x = x_ref[0] * scale + pe_ref[0]                       # (ts, D)
    xo_ref[0] = x.astype(xo_ref.dtype)
    no_ref[0] = _norm_math(x, a_ref[...], b_ref[...], eps).astype(no_ref.dtype)


def _add_norm_kernel(x_ref, d_ref, a_ref, b_ref, xo_ref, no_ref, *, eps):
    # Fused: x_new = x + delta ; x2 = Norm(x_new)
    x = x_ref[...] + d_ref[...]
    xo_ref[...] = x.astype(xo_ref.dtype)
    no_ref[...] = _norm_math(x, a_ref[...], b_ref[...], eps).astype(no_ref.dtype)


def _attention_core(q, kv, mask, o_ref, a_ref, heads, scale):
    # q (tq, D) bf16, kv (Sk, 2D) bf16, mask (Mq, Sk) int32 with Mq in {1, tq}.
    tq, D = q.shape
    dk = D // heads
    for h in range(heads):                                  # static unroll
        lo, hi = h * dk, (h + 1) * dk
        qh, kh, vh = q[:, lo:hi], kv[:, lo:hi], kv[:, D + lo:D + hi]
        # contract on the dk axis without materializing k.T
        s = jax.lax.dot_general(qh, kh, (((1,), (1,)), ((), ())),
                                preferred_element_type=jnp.float32) * scale
        s = jnp.where(mask == 0, jnp.float32(-1e9), s)      # masked_fill(mask==0, -1e9)
        s = s - jnp.max(s, axis=-1, keepdims=True)          # stable softmax
        e = jnp.exp(s)
        p = e / jnp.sum(e, axis=-1, keepdims=True)          # exact softmax (exported probs)
        if a_ref is not None:
            a_ref[0, h] = p.astype(a_ref.dtype)
        pv = jnp.dot(p.astype(jnp.bfloat16), vh,
                     preferred_element_type=jnp.float32)
        o_ref[0, :, lo:hi] = pv.astype(o_ref.dtype)         # direct slice store, no concat


def _self_attn_kernel(q_ref, kv_ref, m_ref, o_ref, *, heads, scale):
    _attention_core(q_ref[0], kv_ref[0], m_ref[0], o_ref, None, heads, scale)


def _cross_attn_kernel(q_ref, kv_ref, m_ref, o_ref, a_ref, *, heads, scale):
    _attention_core(q_ref[0], kv_ref[0], m_ref[0], o_ref, a_ref, heads, scale)


# ---------------------------------------------------------------------------
# Pallas wrappers
# ---------------------------------------------------------------------------

def linear(x, w, b, activation=None, out_dtype=jnp.float32,
           tm=256, tn=512, tk=512):
    """x: (M, K), w: (K, N) bf16, b: (N,) f32 -> (M, N) out_dtype (tiled matmul)."""
    M, K = x.shape
    N = w.shape[1]
    Mp, tm = _row_tiling(M, tm, 8)
    if Mp != M:
        x = jnp.pad(x, ((0, Mp - M), (0, 0)))
    tn = _pick_tile(N, tn, 128)
    tk = _pick_tile(K, tk, 128)
    grid = (Mp // tm, N // tn, K // tk)
    out = pl.pallas_call(
        functools.partial(_linear_kernel, activation=activation),
        grid=grid,
        in_specs=[
            pl.BlockSpec((tm, tk), lambda i, j, k: (i, k)),
            pl.BlockSpec((tk, tn), lambda i, j, k: (k, j)),
            pl.BlockSpec((1, tn), lambda i, j, k: (0, j)),
        ],
        out_specs=pl.BlockSpec((tm, tn), lambda i, j, k: (i, j)),
        out_shape=jax.ShapeDtypeStruct((Mp, N), out_dtype),
        scratch_shapes=[pltpu.VMEM((tm, tn), jnp.float32)],
        compiler_params=pltpu.CompilerParams(
            dimension_semantics=("parallel", "parallel", "arbitrary")),
    )(x, w, b.reshape(1, N))
    return out[:M] if Mp != M else out


def pe_norm(x_emb, pe_table, alpha, bias, d_model, eps=1e-6,
            norm_dtype=jnp.bfloat16, ts_target=512):
    """Fused positional encoding + first Norm.  Returns (x_with_pe f32, Norm(x) bf16)."""
    B, S, D = x_emb.shape
    ts = _pick_tile(S, ts_target, 8)
    pe = pe_table[:S].reshape(1, S, D)
    return pl.pallas_call(
        functools.partial(_pe_norm_kernel, scale=math.sqrt(d_model), eps=eps),
        grid=(B, S // ts),
        in_specs=[
            pl.BlockSpec((1, ts, D), lambda b, s: (b, s, 0)),
            pl.BlockSpec((1, ts, D), lambda b, s: (0, s, 0)),
            pl.BlockSpec((1, D), lambda b, s: (0, 0)),
            pl.BlockSpec((1, D), lambda b, s: (0, 0)),
        ],
        out_specs=(pl.BlockSpec((1, ts, D), lambda b, s: (b, s, 0)),
                   pl.BlockSpec((1, ts, D), lambda b, s: (b, s, 0))),
        out_shape=(jax.ShapeDtypeStruct((B, S, D), jnp.float32),
                   jax.ShapeDtypeStruct((B, S, D), norm_dtype)),
        compiler_params=pltpu.CompilerParams(
            dimension_semantics=("parallel", "parallel")),
    )(x_emb, pe, alpha.reshape(1, D), bias.reshape(1, D))


def add_norm(x, delta, alpha, bias, eps=1e-6, norm_dtype=jnp.bfloat16):
    """Fused residual add + Norm.  Returns (x + delta f32, Norm(x + delta))."""
    B, S, D = x.shape
    M = B * S
    xf = x.reshape(M, D)
    df = delta.reshape(M, D)
    Mp, tm = _row_tiling(M, 512, 8)
    if Mp != M:
        xf = jnp.pad(xf, ((0, Mp - M), (0, 0)))
        df = jnp.pad(df, ((0, Mp - M), (0, 0)))
    xo, no = pl.pallas_call(
        functools.partial(_add_norm_kernel, eps=eps),
        grid=(Mp // tm,),
        in_specs=[
            pl.BlockSpec((tm, D), lambda i: (i, 0)),
            pl.BlockSpec((tm, D), lambda i: (i, 0)),
            pl.BlockSpec((1, D), lambda i: (0, 0)),
            pl.BlockSpec((1, D), lambda i: (0, 0)),
        ],
        out_specs=(pl.BlockSpec((tm, D), lambda i: (i, 0)),
                   pl.BlockSpec((tm, D), lambda i: (i, 0))),
        out_shape=(jax.ShapeDtypeStruct((Mp, D), jnp.float32),
                   jax.ShapeDtypeStruct((Mp, D), norm_dtype)),
        compiler_params=pltpu.CompilerParams(dimension_semantics=("parallel",)),
    )(xf, df, alpha.reshape(1, D), bias.reshape(1, D))
    return xo[:M].reshape(B, S, D), no[:M].reshape(B, S, D)


def attention(q, kv, mask, heads, with_probs=False, tq_target=256):
    """q: (B, Sq, D) bf16, kv: (B, Sk, 2D) bf16, mask: (B, Mq, Sk) int32.
    Returns bf16 context (B, Sq, D) and, if with_probs, f32 probs (B, H, Sq, Sk)."""
    B, Sq, D = q.shape
    Sk = kv.shape[1]
    dk = D // heads
    Mq = mask.shape[1]
    tq = _pick_tile(Sq, tq_target, 8)
    grid = (B, Sq // tq)
    mask = mask.astype(jnp.int32)
    if Mq == 1:
        mask_spec = pl.BlockSpec((1, 1, Sk), lambda b, qi: (b, 0, 0))
    else:
        mask_spec = pl.BlockSpec((1, tq, Sk), lambda b, qi: (b, qi, 0))
    in_specs = [
        pl.BlockSpec((1, tq, D), lambda b, qi: (b, qi, 0)),      # q tile
        pl.BlockSpec((1, Sk, 2 * D), lambda b, qi: (b, 0, 0)),   # K|V resident per batch
        mask_spec,
    ]
    scale = 1.0 / math.sqrt(dk)
    o_spec = pl.BlockSpec((1, tq, D), lambda b, qi: (b, qi, 0))
    o_shape = jax.ShapeDtypeStruct((B, Sq, D), jnp.bfloat16)
    cp = pltpu.CompilerParams(dimension_semantics=("parallel", "parallel"))
    if with_probs:
        return pl.pallas_call(
            functools.partial(_cross_attn_kernel, heads=heads, scale=scale),
            grid=grid, in_specs=in_specs,
            out_specs=(o_spec,
                       pl.BlockSpec((1, heads, tq, Sk), lambda b, qi: (b, 0, qi, 0))),
            out_shape=(o_shape,
                       jax.ShapeDtypeStruct((B, heads, Sq, Sk), jnp.float32)),
            compiler_params=cp,
        )(q, kv, mask)
    return pl.pallas_call(
        functools.partial(_self_attn_kernel, heads=heads, scale=scale),
        grid=grid, in_specs=in_specs,
        out_specs=o_spec, out_shape=o_shape,
        compiler_params=cp,
    )(q, kv, mask)


# ---------------------------------------------------------------------------
# Model glue (parameter setup + orchestration)
# ---------------------------------------------------------------------------

def make_pe_table(max_seq_len, d_model):
    pe = np.zeros((max_seq_len, d_model), dtype=np.float32)
    for pos in range(max_seq_len):
        for i in range(0, d_model, 2):
            pe[pos, i] = math.sin(pos / 10000 ** (2 * i / d_model))
            pe[pos, i + 1] = math.cos(pos / 10000 ** (2 * (i + 1) / d_model))
    return jnp.asarray(pe)


def init_linear(key, d_in, d_out):
    w = jax.random.normal(key, (d_in, d_out), jnp.float32) * 0.02
    return w, jnp.zeros((d_out,), jnp.float32)


def init_mha(key, d_model):
    ks = jax.random.split(key, 4)
    wq, bq = init_linear(ks[0], d_model, d_model)
    wk, bk = init_linear(ks[1], d_model, d_model)
    wv, bv = init_linear(ks[2], d_model, d_model)
    wo, bo = init_linear(ks[3], d_model, d_model)
    return {
        "wq": wq.astype(jnp.bfloat16), "bq": bq,
        "w_kv": jnp.concatenate([wk, wv], axis=1).astype(jnp.bfloat16),
        "b_kv": jnp.concatenate([bk, bv]),
        "wo": wo.astype(jnp.bfloat16), "bo": bo,
    }


def init_decoder_layer(key, d_model, d_ff):
    ks = jax.random.split(key, 4)
    w1, b1 = init_linear(ks[2], d_model, d_ff)
    w2, b2 = init_linear(ks[3], d_ff, d_model)
    return {
        "n1_a": jnp.ones((d_model,), jnp.float32), "n1_b": jnp.zeros((d_model,), jnp.float32),
        "n2_a": jnp.ones((d_model,), jnp.float32), "n2_b": jnp.zeros((d_model,), jnp.float32),
        "n3_a": jnp.ones((d_model,), jnp.float32), "n3_b": jnp.zeros((d_model,), jnp.float32),
        "attn1": init_mha(ks[0], d_model),
        "attn2": init_mha(ks[1], d_model),
        "ff_w1": w1.astype(jnp.bfloat16), "ff_b1": b1,
        "ff_w2": w2.astype(jnp.bfloat16), "ff_b2": b2,
    }


def init_decoder(key, vocab_size, d_model, N, d_ff=2048, max_seq_len=200):
    ks = jax.random.split(key, N + 1)
    return {
        "embed": jax.random.normal(ks[0], (vocab_size, d_model), jnp.float32),
        "pe": make_pe_table(max_seq_len, d_model),
        "layers": [init_decoder_layer(ks[i + 1], d_model, d_ff) for i in range(N)],
        "norm_a": jnp.ones((d_model,), jnp.float32),
        "norm_b": jnp.zeros((d_model,), jnp.float32),
        "d_model": d_model,
    }


def decoder_forward(params, trg, e_outputs, src_mask, trg_mask, heads):
    # trg: (B, S) int32 token ids; e_outputs: (B, S_src, D)
    # src_mask: (B, 1, S_src); trg_mask: (B, S, S)  (compact, broadcast in-kernel)
    d_model = params["d_model"]
    layers = params["layers"]
    N = len(layers)

    # TODO(synk): the embedding gather stays in XLA (data-dependent gather has
    # no clean rectangular BlockSpec); dropout layers are identity (eval mode).
    x_emb = params["embed"][trg]                               # (B, S, D)

    # fused: PE (+sqrt(d_model) scale) and the first layer's norm_1; x2 is bf16
    x, x2 = pe_norm(x_emb, params["pe"],
                    layers[0]["n1_a"], layers[0]["n1_b"], d_model)

    B, S, D = x.shape
    S_src = e_outputs.shape[1]
    e_flat = e_outputs.reshape(B * S_src, D)
    trg_mask_i = trg_mask.astype(jnp.int32)
    src_mask_i = src_mask.astype(jnp.int32)

    decoder_attns = []
    for i, lp in enumerate(layers):
        # ---- self attention (bf16 q/kv streams, q-tiled attention, no attn writeback)
        p1 = lp["attn1"]
        x2f = x2.reshape(B * S, D)
        q = linear(x2f, p1["wq"], p1["bq"], out_dtype=jnp.bfloat16).reshape(B, S, D)
        kv = linear(x2f, p1["w_kv"], p1["b_kv"], out_dtype=jnp.bfloat16).reshape(B, S, 2 * D)
        sa = attention(q, kv, trg_mask_i, heads, with_probs=False)
        sa = linear(sa.reshape(B * S, D), p1["wo"], p1["bo"]).reshape(B, S, D)
        x, x2 = add_norm(x, sa, lp["n2_a"], lp["n2_b"])        # dropout_1 = identity

        # ---- cross attention (fused K|V projection of encoder outputs)
        p2 = lp["attn2"]
        x2f = x2.reshape(B * S, D)
        q = linear(x2f, p2["wq"], p2["bq"], out_dtype=jnp.bfloat16).reshape(B, S, D)
        kv = linear(e_flat, p2["w_kv"], p2["b_kv"], out_dtype=jnp.bfloat16).reshape(B, S_src, 2 * D)
        ca, attn_w = attention(q, kv, src_mask_i, heads, with_probs=True)
        ca = linear(ca.reshape(B * S, D), p2["wo"], p2["bo"]).reshape(B, S, D)
        x, x2 = add_norm(x, ca, lp["n3_a"], lp["n3_b"])        # dropout_2 = identity

        # ---- feed forward (bf16 d_ff intermediate: largest activation in the layer)
        h = linear(x2.reshape(B * S, D), lp["ff_w1"], lp["ff_b1"],
                   activation="relu", out_dtype=jnp.bfloat16)
        ff = linear(h, lp["ff_w2"], lp["ff_b2"]).reshape(B, S, D)
        if i + 1 < N:
            # fold the residual add into the NEXT layer's norm_1
            x, x2 = add_norm(x, ff, layers[i + 1]["n1_a"], layers[i + 1]["n1_b"])
        else:
            # fold the residual add into the final decoder Norm (f32 module output)
            _, x2 = add_norm(x, ff, params["norm_a"], params["norm_b"],
                             norm_dtype=jnp.float32)
        # PyTorch does attn.squeeze().tolist(); we keep squeezed arrays.
        decoder_attns.append(jnp.squeeze(attn_w))

    return x2, decoder_attns


# ---------------------------------------------------------------------------

if __name__ == "__main__":
    B, S_trg, S_src = 2, 8, 8
    d_model, heads, N, vocab = 32, 4, 2, 50

    key = jax.random.PRNGKey(0)
    k_par, k_trg, k_enc = jax.random.split(key, 3)

    params = init_decoder(k_par, vocab, d_model, N)

    trg = jax.random.randint(k_trg, (B, S_trg), 0, vocab, dtype=jnp.int32)
    e_outputs = jax.random.normal(k_enc, (B, S_src, d_model), jnp.float32)
    src_mask = jnp.ones((B, 1, S_src), jnp.int32)
    trg_mask = jnp.tril(jnp.ones((S_trg, S_trg), jnp.int32))[None, :, :].repeat(B, axis=0)

    out, attns = decoder_forward(params, trg, e_outputs, src_mask, trg_mask, heads)
    out = jax.block_until_ready(out)
    for a in attns:
        jax.block_until_ready(a)

    assert out.shape == (B, S_trg, d_model)
    assert out.dtype == jnp.float32
    assert len(attns) == N and attns[0].shape == (B, heads, S_trg, S_src)
    print("KERNEL_OK")
</pallas_src>

<mosaic_0001>
module attributes {stable_mosaic.version = 11 : i64} {
  func.func @_pe_norm_kernel(%arg0: i32, %arg1: i32, %arg2: memref<1x8x32xf32, #tpu.memory_space<vmem>>, %arg3: memref<1x8x32xf32, #tpu.memory_space<vmem>>, %arg4: memref<1x32xf32, #tpu.memory_space<vmem>>, %arg5: memref<1x32xf32, #tpu.memory_space<vmem>>, %arg6: memref<1x8x32xf32, #tpu.memory_space<vmem>>, %arg7: memref<1x8x32xbf16, #tpu.memory_space<vmem>>) attributes {dimension_semantics = [#tpu.dimension_semantics<parallel>, #tpu.dimension_semantics<parallel>], iteration_bounds = array<i64: 2, 1>, scalar_prefetch = 0 : i64, scratch_operands = 0 : i64, tpu.core_type = #tpu.core_type<tc>, window_params = [{transform_indices = @transform_0, window_bounds = array<i64: 1, 8, 32>}, {transform_indices = @transform_1, window_bounds = array<i64: 1, 8, 32>}, {pipeline_mode = #tpu.pipeline_mode<synchronous>, transform_indices = @transform_2, window_bounds = array<i64: 1, 32>}, {pipeline_mode = #tpu.pipeline_mode<synchronous>, transform_indices = @transform_3, window_bounds = array<i64: 1, 32>}, {transform_indices = @transform_4, window_bounds = array<i64: 1, 8, 32>}, {transform_indices = @transform_5, window_bounds = array<i64: 1, 8, 32>}]} {
    %c0 = arith.constant 0 : index
    %c0_0 = arith.constant 0 : index
    %c0_1 = arith.constant 0 : index
    %0 = vector.load %arg2[%c0, %c0_0, %c0_1] : memref<1x8x32xf32, #tpu.memory_space<vmem>>, vector<1x8x32xf32>
    %1 = vector.shape_cast %0 : vector<1x8x32xf32> to vector<8x32xf32>
    %cst = arith.constant 5.65685415 : f32
    %2 = vector.broadcast %cst : f32 to vector<8x32xf32>
    %3 = arith.mulf %1, %2 : vector<8x32xf32>
    %c0_2 = arith.constant 0 : index
    %c0_3 = arith.constant 0 : index
    %c0_4 = arith.constant 0 : index
    %4 = vector.load %arg3[%c0_2, %c0_3, %c0_4] : memref<1x8x32xf32, #tpu.memory_space<vmem>>, vector<1x8x32xf32>
    %5 = vector.shape_cast %4 : vector<1x8x32xf32> to vector<8x32xf32>
    %6 = arith.addf %3, %5 : vector<8x32xf32>
    %c0_5 = arith.constant 0 : index
    %c0_6 = arith.constant 0 : index
    %c0_7 = arith.constant 0 : index
    %7 = vector.load %arg6[%c0_5, %c0_6, %c0_7] : memref<1x8x32xf32, #tpu.memory_space<vmem>>, vector<1x8x32xf32>
    %8 = vector.shape_cast %7 : vector<1x8x32xf32> to vector<8x32xf32>
    %9 = vector.shape_cast %6 : vector<8x32xf32> to vector<1x8x32xf32>
    tpu.vector_store %arg6[%c0_5, %c0_6, %c0_7], %9 {strides = array<i32>} : memref<1x8x32xf32, #tpu.memory_space<vmem>>, vector<1x8x32xf32>,
    %c0_8 = arith.constant 0 : index
    %c0_9 = arith.constant 0 : index
    %10 = vector.load %arg4[%c0_8, %c0_9] : memref<1x32xf32, #tpu.memory_space<vmem>>, vector<1x32xf32>
    %c0_10 = arith.constant 0 : index
    %c0_11 = arith.constant 0 : index
    %11 = vector.load %arg5[%c0_10, %c0_11] : memref<1x32xf32, #tpu.memory_space<vmem>>, vector<1x32xf32>
    %cst_12 = arith.constant dense<0.000000e+00> : vector<8xf32>
    %12 = vector.multi_reduction <add>, %6, %cst_12 [1] : vector<8x32xf32> to vector<8xf32>
    %13 = vector.shape_cast %12 : vector<8xf32> to vector<8x1xf32>
    %cst_13 = arith.constant 3.200000e+01 : f32
    %14 = vector.broadcast %cst_13 : f32 to vector<8x1xf32>
    %15 = arith.divf %13, %14 : vector<8x1xf32>
    %16 = vector.broadcast %15 : vector<8x1xf32> to vector<8x32xf32>
    %17 = arith.subf %6, %16 : vector<8x32xf32>
    %18 = arith.mulf %17, %17 : vector<8x32xf32>
    %cst_14 = arith.constant dense<0.000000e+00> : vector<8xf32>
    %19 = vector.multi_reduction <add>, %18, %cst_14 [1] : vector<8x32xf32> to vector<8xf32>
    %20 = vector.shape_cast %19 : vector<8xf32> to vector<8x1xf32>
    %cst_15 = arith.constant 3.100000e+01 : f32
    %21 = vector.broadcast %cst_15 : f32 to vector<8x1xf32>
    %22 = arith.divf %20, %21 : vector<8x1xf32>
    %23 = math.sqrt %22 : vector<8x1xf32>
    %24 = vector.broadcast %10 : vector<1x32xf32> to vector<8x32xf32>
    %25 = arith.mulf %24, %17 : vector<8x32xf32>
    %cst_16 = arith.constant 9.99999997E-7 : f32
    %26 = vector.broadcast %cst_16 : f32 to vector<8x1xf32>
    %27 = arith.addf %23, %26 : vector<8x1xf32>
    %28 = vector.broadcast %27 : vector<8x1xf32> to vector<8x32xf32>
    %29 = arith.divf %25, %28 : vector<8x32xf32>
    %30 = vector.broadcast %11 : vector<1x32xf32> to vector<8x32xf32>
    %31 = arith.addf %29, %30 : vector<8x32xf32>
    %32 = arith.truncf %31 : vector<8x32xf32> to vector<8x32xbf16>
    %c0_17 = arith.constant 0 : index
    %c0_18 = arith.constant 0 : index
    %c0_19 = arith.constant 0 : index
    %33 = vector.load %arg7[%c0_17, %c0_18, %c0_19] : memref<1x8x32xbf16, #tpu.memory_space<vmem>>, vector<1x8x32xbf16>
    %34 = vector.shape_cast %33 : vector<1x8x32xbf16> to vector<8x32xbf16>
    %35 = vector.shape_cast %32 : vector<8x32xbf16> to vector<1x8x32xbf16>
    tpu.vector_store %arg7[%c0_17, %c0_18, %c0_19], %35 {strides = array<i32>} : memref<1x8x32xbf16, #tpu.memory_space<vmem>>, vector<1x8x32xbf16>,
    return
  }
  func.func @transform_0(%arg0: i32, %arg1: i32) -> (i32, i32, i32) {
    %c0_i32 = arith.constant 0 : i32
    %c0_i32_0 = arith.constant 0 : i32
    return %arg0, %arg1, %c0_i32 : i32, i32, i32
  }
  func.func @transform_1(%arg0: i32, %arg1: i32) -> (i32, i32, i32) {
    %c0_i32 = arith.constant 0 : i32
    %c0_i32_0 = arith.constant 0 : i32
    %c0_i32_1 = arith.constant 0 : i32
    return %c0_i32, %arg1, %c0_i32_0 : i32, i32, i32
  }
  func.func @transform_2(%arg0: i32, %arg1: i32) -> (i32, i32) {
    %c0_i32 = arith.constant 0 : i32
    %c0_i32_0 = arith.constant 0 : i32
    %c0_i32_1 = arith.constant 0 : i32
    return %c0_i32, %c0_i32_0 : i32, i32
  }
  func.func @transform_3(%arg0: i32, %arg1: i32) -> (i32, i32) {
    %c0_i32 = arith.constant 0 : i32
    %c0_i32_0 = arith.constant 0 : i32
    %c0_i32_1 = arith.constant 0 : i32
    return %c0_i32, %c0_i32_0 : i32, i32
  }
  func.func @transform_4(%arg0: i32, %arg1: i32) -> (i32, i32, i32) {
    %c0_i32 = arith.constant 0 : i32
    %c0_i32_0 = arith.constant 0 : i32
    return %arg0, %arg1, %c0_i32 : i32, i32, i32
  }
  func.func @transform_5(%arg0: i32, %arg1: i32) -> (i32, i32, i32) {
    %c0_i32 = arith.constant 0 : i32
    %c0_i32_0 = arith.constant 0 : i32
    return %arg0, %arg1, %c0_i32 : i32, i32, i32
  }
}

</mosaic_0001>

<llo_original>
// kernel: tpu_custom_call.1
$region0: #{tpu_custom_call.1}
  #allocation0 [shape = 'u32[]', space=smem, size = 0x4, offset = 0x4, fixed_abs, tag = 'smem constant byte address 0x4 - core index']
  #allocation1 [shape = 'u32[144,128]{1,0:T(1,128)}', space=vmem, size = 0x12000, scoped, tag = 'internal scratch']
  %s0 = inlined_call_operand.hbm [shape: f32[2,8,32], index: 0, kind: input, shape index: {}]
  %s1 = inlined_call_operand.hbm [shape: f32[1,8,32], index: 1, kind: input, shape index: {}]
  %s2 = inlined_call_operand.vmem [shape: f32[1,32], index: 2, kind: input, shape index: {}]
  %s3 = inlined_call_operand.vmem [shape: f32[1,32], index: 3, kind: input, shape index: {}]
  %s4 = inlined_call_operand.hbm [shape: f32[2,8,32], index: 4, kind: output, shape index: {0}]
  %s5 = inlined_call_operand.hbm [shape: bf16[2,8,32], index: 5, kind: output, shape index: {1}]
  %6 = xla_tuple %s4, %s5
  %s7 = sld [smem:[#allocation0]]
  $region65: #{tpu_custom_call.1} parent=0
    _
  %s9 = ssub.s32 1, %s7
  %s10 = scalar_select 0, %s9, %s7
  $region1: #{tpu_custom_call.1} parent=0
    #allocation2 [shape = 'u8[8192]{0}', space=vmem, size = 0x2000, scoped, tag = 'input window, operand 0']
    #allocation3 [shape = 's32[2]{0}', space=sflag, size = 0x8, scoped, tag = 'scoped memory for tpu_custom_call.1']
    #allocation4 [shape = 's32[2]{0}', space=sflag, size = 0x8, scoped, tag = 'scoped memory for tpu_custom_call.1']
    #allocation5 [shape = 'u8[4096]{0}', space=vmem, size = 0x1000, scoped, tag = 'input window, operand 1, single buffered']
    #allocation6 [shape = 's32[1]{0}', space=sflag, size = 0x4, scoped, tag = 'scoped memory for tpu_custom_call.1']
    #allocation7 [shape = 'u8[8192]{0}', space=vmem, size = 0x2000, scoped, tag = 'output window, operand 0']
    #allocation8 [shape = 'u8[4096]{0}', space=vmem, size = 0x1000, scoped, tag = 'output window, operand 1']
    #allocation9 [shape = 's32[2]{0}', space=sflag, size = 0x8, scoped, tag = 'scoped memory for tpu_custom_call.1']
    %11 = vsyncpa [#allocation3], 0
    %s12 = scalar_lea.sflag [#allocation3], 1
    %13 = vsyncpa %s12, 0
    %14 = vsyncpa [#allocation6], 0
    %15 = vsyncpa [#allocation4], 0
    %s16 = scalar_lea.sflag [#allocation4], 1
    %17 = vsyncpa %s16, 0
    %18 = vsyncpa [#allocation9], 0
    %s19 = scalar_lea.sflag [#allocation9], 1
    %20 = vsyncpa %s19, 0
    loop: start=0, step=1, limit=4
    $region2: #{tpu_custom_call.1} parent=1 // loop_pre_header
      _
    $region3: #{tpu_custom_call.1} parent=1 // loop_header
      %s22 = sphi 0, %s26
      %p23 = scmp.ge.s32.totalorder %s22, 4
      %s29 = sphi 0, %s41
      %s30 = sphi 0, %s37
      %s31 = sphi 0, %s29
      %s32 = sphi 0, %s30
      %s33 = sphi 0, %s31
      %s34 = sphi 0, %s32
      %s46 = sphi 0, %s48
      %s49 = sphi 0, %s46
      %s50 = sphi 0, %s49
      %s66 = sphi 0, %s50
      %s72 = sphi 0, %s74
      %s75 = sphi 0, %s72
      %s76 = sphi 0, %s75
      %s92 = sphi 0, %s76
      %s96 = sphi 0, %s96
      %s98 = sphi 0, %s96
      %s99 = sphi 0, %s98
      %s113 = sphi 0, %s99
      %s117 = sphi 0, %s117
      %s119 = sphi 0, %s117
      %s120 = sphi 0, %s119
      %s134 = sphi 0, %s120
      %s142 = sphi 0, %s144
      %s145 = sphi 0, %s142
      %s146 = sphi 0, %s145
      %s162 = sphi 0, %s146
      %s170 = sphi 0, %s172
      %s173 = sphi 0, %s170
      %s174 = sphi 0, %s173
      %s190 = sphi 0, %s174
    $region4: #{tpu_custom_call.1} parent=1 // loop_header_branch
      %25 = sbr.rel (%p23) target = $region8
    $region5: #{tpu_custom_call.1} parent=1 // loop_body
      %s27 = ssub.s32 %s22, 1
      %s28 = ssub.s32 %s22, 2
      %s35 = sadd.s32 1, %s30
      %p36 = scmp.ge.s32.totalorder %s35, 1
      %s37 = scalar_select %p36, 0, %s35
      %s38 = sadd.s32 1, %s29
      %s39 = scalar_select %p36, %s38, %s29
      %p40 = scmp.ge.s32.totalorder %s39, 2
      %s41 = scalar_select %p40, 0, %s39
      %s42 = ssub.s32 %s29, %s41
      %s43 = ssub.s32 %s30, %s37
      %s44 = sor.u32 %s42, %s43
      %p45 = scmp.eq.s32.totalorder %s44, 0
      %s47 = sadd.s32 %s46, 1
      %s48 = scalar_select %p45, %s46, %s47
      %p51 = pneg %p45
      %p52 = scmp.eq.s32.totalorder %s22, 1
      %p53 = por %p51, %p52
      %p54 = scmp.ne.s32.totalorder %s46, %s49
      %p55 = scmp.eq.s32.totalorder %s22, 0
      %p56 = por %p54, %p55
      %p57 = scmp.ne.s32.totalorder %s46, %s49
      %p58 = scmp.eq.s32.totalorder %s27, 1
      %p59 = por %p57, %p58
      %p60 = scmp.ne.s32.totalorder %s49, %s50
      %p61 = scmp.eq.s32.totalorder %s27, 0
      %p62 = por %p60, %p61
      %p63 = scmp.ne.s32.totalorder %s49, %s50
      %p64 = scmp.eq.s32.totalorder %s28, 1
      %p65 = por %p63, %p64
      %p67 = scmp.ne.s32.totalorder %s50, %s66
      %p68 = scmp.eq.s32.totalorder %s28, 0
      %p69 = por %p67, %p68
      %s70 = ssub.s32 %s30, %s37
      %p71 = scmp.eq.s32.totalorder %s70, 0
      %s73 = sadd.s32 %s72, 1
      %s74 = scalar_select %p71, %s72, %s73
      %p77 = pneg %p71
      %p78 = scmp.eq.s32.totalorder %s22, 1
      %p79 = por %p77, %p78
      %p80 = scmp.ne.s32.totalorder %s72, %s75
      %p81 = scmp.eq.s32.totalorder %s22, 0
      %p82 = por %p80, %p81
      %p83 = scmp.ne.s32.totalorder %s72, %s75
      %p84 = scmp.eq.s32.totalorder %s27, 1
      %p85 = por %p83, %p84
      %p86 = scmp.ne.s32.totalorder %s75, %s76
      %p87 = scmp.eq.s32.totalorder %s27, 0
      %p88 = por %p86, %p87
      %p89 = scmp.ne.s32.totalorder %s75, %s76
      %p90 = scmp.eq.s32.totalorder %s28, 1
      %p91 = por %p89, %p90
      %p93 = scmp.ne.s32.totalorder %s76, %s92
      %p94 = scmp.eq.s32.totalorder %s28, 0
      %p95 = por %p93, %p94
      %s97 = sadd.s32 %s96, 1
      %p100 = scmp.eq.s32.totalorder %s22, 1
      %p101 = scmp.ne.s32.totalorder %s96, %s98
      %p102 = scmp.eq.s32.totalorder %s22, 0
      %p103 = por %p101, %p102
      %p104 = scmp.ne.s32.totalorder %s96, %s98
      %p105 = scmp.eq.s32.totalorder %s27, 1
      %p106 = por %p104, %p105
      %p107 = scmp.ne.s32.totalorder %s98, %s99
      %p108 = scmp.eq.s32.totalorder %s27, 0
      %p109 = por %p107, %p108
      %p110 = scmp.ne.s32.totalorder %s98, %s99
      %p111 = scmp.eq.s32.totalorder %s28, 1
      %p112 = por %p110, %p111
      %p114 = scmp.ne.s32.totalorder %s99, %s113
      %p115 = scmp.eq.s32.totalorder %s28, 0
      %p116 = por %p114, %p115
      %s118 = sadd.s32 %s117, 1
      %p121 = scmp.eq.s32.totalorder %s22, 1
      %p122 = scmp.ne.s32.totalorder %s117, %s119
      %p123 = scmp.eq.s32.totalorder %s22, 0
      %p124 = por %p122, %p123
      %p125 = scmp.ne.s32.totalorder %s117, %s119
      %p126 = scmp.eq.s32.totalorder %s27, 1
      %p127 = por %p125, %p126
      %p128 = scmp.ne.s32.totalorder %s119, %s120
      %p129 = scmp.eq.s32.totalorder %s27, 0
      %p130 = por %p128, %p129
      %p131 = scmp.ne.s32.totalorder %s119, %s120
      %p132 = scmp.eq.s32.totalorder %s28, 1
      %p133 = por %p131, %p132
      %p135 = scmp.ne.s32.totalorder %s120, %s134
      %p136 = scmp.eq.s32.totalorder %s28, 0
      %p137 = por %p135, %p136
      %s138 = ssub.s32 %s29, %s41
      %s139 = ssub.s32 %s30, %s37
      %s140 = sor.u32 %s138, %s139
      %p141 = scmp.eq.s32.totalorder %s140, 0
      %s143 = sadd.s32 %s142, 1
      %s144 = scalar_select %p141, %s142, %s143
      %p147 = pneg %p141
      %p148 = scmp.eq.s32.totalorder %s22, 1
      %p149 = por %p147, %p148
      %p150 = scmp.ne.s32.totalorder %s142, %s145
      %p151 = scmp.eq.s32.totalorder %s22, 0
      %p152 = por %p150, %p151
      %p153 = scmp.ne.s32.totalorder %s142, %s145
      %p154 = scmp.eq.s32.totalorder %s27, 1
      %p155 = por %p153, %p154
      %p156 = scmp.ne.s32.totalorder %s145, %s146
      %p157 = scmp.eq.s32.totalorder %s27, 0
      %p158 = por %p156, %p157
      %p159 = scmp.ne.s32.totalorder %s145, %s146
      %p160 = scmp.eq.s32.totalorder %s28, 1
      %p161 = por %p159, %p160
      %p163 = scmp.ne.s32.totalorder %s146, %s162
      %p164 = scmp.eq.s32.totalorder %s28, 0
      %p165 = por %p163, %p164
      %s166 = ssub.s32 %s29, %s41
      %s167 = ssub.s32 %s30, %s37
      %s168 = sor.u32 %s166, %s167
      %p169 = scmp.eq.s32.totalorder %s168, 0
      %s171 = sadd.s32 %s170, 1
      %s172 = scalar_select %p169, %s170, %s171
      %p175 = pneg %p169
      %p176 = scmp.eq.s32.totalorder %s22, 1
      %p177 = por %p175, %p176
      %p178 = scmp.ne.s32.totalorder %s170, %s173
      %p179 = scmp.eq.s32.totalorder %s22, 0
      %p180 = por %p178, %p179
      %p181 = scmp.ne.s32.totalorder %s170, %s173
      %p182 = scmp.eq.s32.totalorder %s27, 1
      %p183 = por %p181, %p182
      %p184 = scmp.ne.s32.totalorder %s173, %s174
      %p185 = scmp.eq.s32.totalorder %s27, 0
      %p186 = por %p184, %p185
      %p187 = scmp.ne.s32.totalorder %s173, %s174
      %p188 = scmp.eq.s32.totalorder %s28, 1
      %p189 = por %p187, %p188
      %p191 = scmp.ne.s32.totalorder %s174, %s190
      %p192 = scmp.eq.s32.totalorder %s28, 0
      %p193 = por %p191, %p192
      %p194 = scmp.le.s32.totalorder 1, %s22
      %p195 = scmp.lt.s32.totalorder %s22, 3
      %p196 = pnand %p194, %p195
      %p197 = pneg %p196
      // Predicated region
      $region9: #{tpu_custom_call.1} parent=5 // pred_check
        _
      $region10: #{tpu_custom_call.1} parent=5 // pred_check_branch
        %199 = sbr.rel (%p196) target = $region12
      $region11: #{tpu_custom_call.1} parent=5 // pred_region
        %s200 = ssub.s32 %s22, 1
        // Predicated region
        $region13: #{tpu_custom_call.1} parent=11 // pred_check
          %p201 = pneg %p88
        $region14: #{tpu_custom_call.1} parent=11 // pred_check_branch
          %203 = sbr.rel (%p201) target = $region16
        $region15: #{tpu_custom_call.1} parent=11 // pred_region
          %s205 = ssub.s32 128, 128
          %206 = vsyncadd [#allocation6], %s205
          %s207 = smul.addr %s32, 128
          %s208 = scalar_lea.hbm %s1, %s207
          %s210 = sshll.u32 [#allocation5], 4
          %s211 = int_to_ptr.vmem [resolvable:$true] %s210
          %213 = dma.hbm_to_vmem [thread:$0]  %s208, 128, %s211, [#allocation6]
        $region16: #{tpu_custom_call.1} parent=11 // pred_fallthru
          _
        // Predicated region
        $region17: #{tpu_custom_call.1} parent=11 // pred_check
          %p214 = pneg %p109
        $region18: #{tpu_custom_call.1} parent=11 // pred_check_branch
          %216 = sbr.rel (%p214) target = $region20
        $region19: #{tpu_custom_call.1} parent=11 // pred_region
          _
        $region20: #{tpu_custom_call.1} parent=11 // pred_fallthru
          _
        // Predicated region
        $region21: #{tpu_custom_call.1} parent=11 // pred_check
          %p217 = pneg %p130
        $region22: #{tpu_custom_call.1} parent=11 // pred_check_branch
          %219 = sbr.rel (%p217) target = $region24
        $region23: #{tpu_custom_call.1} parent=11 // pred_region
          _
        $region24: #{tpu_custom_call.1} parent=11 // pred_fallthru
          _
      $region12: #{tpu_custom_call.1} parent=5 // pred_fallthru
        _
      %p220 = scmp.lt.s32.totalorder %s22, 2
      // Predicated region
      $region25: #{tpu_custom_call.1} parent=5 // pred_check
        %p221 = pneg %p220
      $region26: #{tpu_custom_call.1} parent=5 // pred_check_branch
        %223 = sbr.rel (%p221) target = $region28
      $region27: #{tpu_custom_call.1} parent=5 // pred_region
        // Predicated region
        $region29: #{tpu_custom_call.1} parent=27 // pred_check
          %p224 = pneg %p56
        $region30: #{tpu_custom_call.1} parent=27 // pred_check_branch
          %226 = sbr.rel (%p224) target = $region32
        $region31: #{tpu_custom_call.1} parent=27 // pred_region
          %s227 = sand.u32 %s46, 1
          %s228 = scalar_lea.sflag [#allocation3], %s227
          %s229 = sand.u32 %s46, 1
          %s230 = smul.addr %s229, 8
          %s231 = scalar_lea.vmem [#allocation2], %s230
          %s233 = ssub.s32 128, 128
          %234 = vsyncadd %s228, %s233
          %s235 = sadd.s32 %s30, %s29
          %s236 = smul.addr %s235, 128
          %s237 = scalar_lea.hbm %s0, %s236
          %s239 = sshll.u32 %s231, 4
          %s240 = int_to_ptr.vmem [resolvable:$true] %s239
          %242 = dma.hbm_to_vmem [thread:$0]  %s237, 128, %s240, %s228
        $region32: #{tpu_custom_call.1} parent=27 // pred_fallthru
          _
      $region28: #{tpu_custom_call.1} parent=5 // pred_fallthru
        _
      %p243 = scmp.le.s32.totalorder 1, %s22
      %p244 = scmp.lt.s32.totalorder %s22, 3
      %p245 = pnand %p243, %p244
      %p246 = pneg %p245
      // Predicated region
      $region33: #{tpu_custom_call.1} parent=5 // pred_check
        _
      $region34: #{tpu_custom_call.1} parent=5 // pred_check_branch
        %248 = sbr.rel (%p245) target = $region36
      $region35: #{tpu_custom_call.1} parent=5 // pred_region
        %s249 = ssub.s32 %s22, 1
        %s250 = sand.u32 %s49, 1
        %s251 = scalar_lea.sflag [#allocation3], %s250
        %s252 = sand.u32 %s49, 1
        %s253 = smul.addr %s252, 8
        %s254 = scalar_lea.vmem [#allocation2], %s253
        // Predicated region
        $region37: #{tpu_custom_call.1} parent=35 // pred_check
          %p255 = pneg %p62
        $region38: #{tpu_custom_call.1} parent=35 // pred_check_branch
          %257 = sbr.rel (%p255) target = $region40
        $region39: #{tpu_custom_call.1} parent=35 // pred_region
          %258 = dma.done %s251, 128
        $region40: #{tpu_custom_call.1} parent=35 // pred_fallthru
          _
        // Predicated region
        $region41: #{tpu_custom_call.1} parent=35 // pred_check
          %p259 = pneg %p88
        $region42: #{tpu_custom_call.1} parent=35 // pred_check_branch
          %261 = sbr.rel (%p259) target = $region44
        $region43: #{tpu_custom_call.1} parent=35 // pred_region
          %262 = dma.done [#allocation6], 128
        $region44: #{tpu_custom_call.1} parent=35 // pred_fallthru
          _
        %s263 = sand.u32 %s49, 1
        %s264 = scalar_lea.sflag [#allocation3], %s263
        %s265 = sand.u32 %s49, 1
        %s266 = smul.addr %s265, 8
        %s267 = scalar_lea.vmem [#allocation2], %s266
        %p268 = pneg %p62
        %p269 = pneg %p59
        %p270 = pneg %p88
        %p271 = pneg %p85
        %p272 = pneg %p109
        %p273 = pneg %p106
        %p274 = pneg %p130
        %p275 = pneg %p127
        %p276 = pneg %p158
        %p277 = pneg %p155
        %s278 = sand.u32 %s145, 1
        %s279 = scalar_lea.sflag [#allocation4], %s278
        %s280 = sand.u32 %s145, 1
        %s281 = smul.addr %s280, 8
        %s282 = scalar_lea.vmem [#allocation7], %s281
        %p283 = pneg %p186
        %p284 = pneg %p183
        %s285 = sand.u32 %s173, 1
        %s286 = scalar_lea.sflag [#allocation9], %s285
        %s287 = sand.u32 %s173, 1
        %s288 = smul.addr %s287, 4
        %s289 = scalar_lea.vmem [#allocation8], %s288
        %v290 = vld [vmem:[%s254] sm:$0xff]
        %v291 = vmul.f32 %v290, 5.656854
        %v292 = vld [vmem:[#allocation5] sm:$0xff]
        %v293 = vadd.f32 %v291, %v292
        %vm294 = vcmask 261120
        %295 = vst.msk [vmem:[%s282] sm:$0xff] %vm294, %v293
        %v296 = vld [vmem:[%s2] sm:$0x1]
        %v297 = vld [vmem:[%s3] sm:$0x1]
        %v298 = vsel %vm294, %v293, 0.0
        %299 = vadd.xlane.f32.xlu0 %v298
        %v300 = vpop.xlane.xlu0 %299
        %v301 = vrcp.pop 32.0
        %v302 = vmul.f32 %v300, %v301
        %v303 = vsub.f32 %v293, %v302
        %v304 = vmul.f32 %v303, %v303
        %v305 = vsel %vm294, %v304, 0.0
        %306 = vadd.xlane.f32.xlu0 %v305
        %v307 = vpop.xlane.xlu0 %306
        %v308 = vrcp.pop 31.0
        %v309 = vmul.f32 %v307, %v308
        %v310 = vrsqrt.pop %v309
        %v311 = vmul.f32 %v309, %v310
        %vm312 = vcmp.eq.f32.partialorder %v309, inf
        %v313 = vsel %vm312, %v309, %v311
        %vm314 = vcmp.eq.f32.partialorder %v309, 0.0
        %v315 = vand.u32 %v309, 2147483648
        %v316 = vsel %vm314, %v315, %v313
        %v318 = vlaneseq
        %v319 = vshrl.u32 %v318, 7
        %v320 = vsub.s32 0, %v319
        %v321 = vrot.slane %v296, %v320
        %v323 = vmul.f32 %v321, %v303
        %v324 = vadd.f32 %v316, 1e-06
        %v325 = vrcp.pop %v324
        %v326 = vmul.f32 %v323, %v325
        %v328 = vlaneseq
        %v329 = vshrl.u32 %v328, 7
        %v330 = vsub.s32 0, %v329
        %v331 = vrot.slane %v297, %v330
        %v333 = vadd.f32 %v326, %v331
        %v334 = vpack.c.bf16 %v333, %v333
        %vm335 = vcmask 257024
        %336 = vst.msk [vmem:[%s289] sm:$0xf] %vm335, %v334
        %s337 = sand.u32 %s145, 1
        %s338 = scalar_lea.sflag [#allocation4], %s337
        %s339 = sand.u32 %s145, 1
        %s340 = smul.addr %s339, 8
        %s341 = scalar_lea.vmem [#allocation7], %s340
        %s342 = sand.u32 %s173, 1
        %s343 = scalar_lea.sflag [#allocation9], %s342
        %s344 = sand.u32 %s173, 1
        %s345 = smul.addr %s344, 4
        %s346 = scalar_lea.vmem [#allocation8], %s345
        // Predicated region
        $region45: #{tpu_custom_call.1} parent=35 // pred_check
          %p347 = pneg %p155
        $region46: #{tpu_custom_call.1} parent=35 // pred_check_branch
          %349 = sbr.rel (%p347) target = $region48
        $region47: #{tpu_custom_call.1} parent=35 // pred_region
          %s351 = ssub.s32 128, 128
          %352 = vsyncadd %s338, %s351
          %s353 = sadd.s32 %s32, %s31
          %s354 = smul.addr %s353, 128
          %s355 = scalar_lea.hbm %s4, %s354
          %s357 = sshll.u32 %s341, 4
          %s358 = int_to_ptr.vmem [resolvable:$true] %s357
          %360 = dma.vmem_to_hbm [thread:$0]  %s358, 128, %s355, %s338
        $region48: #{tpu_custom_call.1} parent=35 // pred_fallthru
          _
        // Predicated region
        $region49: #{tpu_custom_call.1} parent=35 // pred_check
          %p361 = pneg %p183
        $region50: #{tpu_custom_call.1} parent=35 // pred_check_branch
          %363 = sbr.rel (%p361) target = $region52
        $region51: #{tpu_custom_call.1} parent=35 // pred_region
          %s365 = ssub.s32 64, 64
          %366 = vsyncadd %s343, %s365
          %s367 = sadd.s32 %s32, %s31
          %s368 = smul.addr %s367, 64
          %s369 = scalar_lea.hbm %s5, %s368
          %s371 = sshll.u32 %s346, 4
          %s372 = int_to_ptr.vmem [resolvable:$true] %s371
          %374 = dma.vmem_to_hbm [thread:$0]  %s372, 64, %s369, %s343
        $region52: #{tpu_custom_call.1} parent=35 // pred_fallthru
          _
      $region36: #{tpu_custom_call.1} parent=5 // pred_fallthru
        _
      %p375 = scmp.le.s32.totalorder 2, %s22
      // Predicated region
      $region53: #{tpu_custom_call.1} parent=5 // pred_check
        %p376 = pneg %p375
      $region54: #{tpu_custom_call.1} parent=5 // pred_check_branch
        %378 = sbr.rel (%p376) target = $region56
      $region55: #{tpu_custom_call.1} parent=5 // pred_region
        %s379 = ssub.s32 %s22, 2
        // Predicated region
        $region57: #{tpu_custom_call.1} parent=55 // pred_check
          %p380 = pneg %p161
        $region58: #{tpu_custom_call.1} parent=55 // pred_check_branch
          %382 = sbr.rel (%p380) target = $region60
        $region59: #{tpu_custom_call.1} parent=55 // pred_region
          %s383 = sand.u32 %s146, 1
          %s384 = scalar_lea.sflag [#allocation4], %s383
          %s385 = sand.u32 %s146, 1
          %s386 = smul.addr %s385, 8
          %s387 = scalar_lea.vmem [#allocation7], %s386
          %388 = dma.done %s384, 128
        $region60: #{tpu_custom_call.1} parent=55 // pred_fallthru
          _
        // Predicated region
        $region61: #{tpu_custom_call.1} parent=55 // pred_check
          %p389 = pneg %p189
        $region62: #{tpu_custom_call.1} parent=55 // pred_check_branch
          %391 = sbr.rel (%p389) target = $region64
        $region63: #{tpu_custom_call.1} parent=55 // pred_region
          %s392 = sand.u32 %s174, 1
          %s393 = scalar_lea.sflag [#allocation9], %s392
          %s394 = sand.u32 %s174, 1
          %s395 = smul.addr %s394, 4
          %s396 = scalar_lea.vmem [#allocation8], %s395
          %397 = dma.done %s393, 64
        $region64: #{tpu_custom_call.1} parent=55 // pred_fallthru
          _
      $region56: #{tpu_custom_call.1} parent=5 // pred_fallthru
        _
    $region6: #{tpu_custom_call.1} parent=1 // loop_footer
      %s26 = sadd.s32 1, %s22
    $region7: #{tpu_custom_call.1} parent=1 // loop_footer_branch
      %21 = sbr.rel target = $region3
    $region8: #{tpu_custom_call.1} parent=1 // loop_exit
      _
    %398 = vsyncpa [#allocation3], 1
    %s399 = scalar_lea.sflag [#allocation3], 1
    %400 = vsyncpa %s399, 1
    %401 = vsyncpa [#allocation6], 1
    %402 = vsyncpa [#allocation4], 1
    %s403 = scalar_lea.sflag [#allocation4], 1
    %404 = vsyncpa %s403, 1
    %405 = vsyncpa [#allocation9], 1
    %s406 = scalar_lea.sflag [#allocation9], 1
    %407 = vsyncpa %s406, 1

</llo_original>
